<compile_context>
chip_gen: v5e
topology: v5e:2x2
jax: 0.10.0
libtpu: 0.0.40
codegen_flags: <defaults>
</compile_context>

<pallas_src>
import functools

import jax
import jax.numpy as jnp
import numpy as np
from jax.experimental import pallas as pl
from jax.experimental.pallas import tpu as pltpu


def _round_up(x, m):
    return ((x + m - 1) // m) * m


def _ocl_kernel(emb_ref, sq_col_ref, sq_row_ref, lab_col_ref, lab_row_ref,
                out_ref, *, margin, batch, tb, n_blk, padded):
    i_blk = pl.program_id(0)
    j_blk = pl.program_id(1)

    # Output block index depends only on i -> resident across the inner j loop.
    @pl.when(j_blk == 0)
    def _init():
        out_ref[...] = jnp.zeros_like(out_ref)

    # Pairs exist only at i < j.  Tiles strictly below the block diagonal do no
    # compute, and since every input has a constant block index they also issue
    # no DMA.
    @pl.when(i_blk <= j_blk)
    def _compute():
        i0 = pl.multiple_of(i_blk * tb, tb)
        j0 = pl.multiple_of(j_blk * tb, tb)

        ei = emb_ref[pl.ds(i0, tb), :]                       # (tb, dp)
        ej = emb_ref[pl.ds(j0, tb), :]                       # (tb, dp)

        # Gram tile on the MXU; contract dim 1 against dim 1 (no transpose),
        # f32 accumulation even when the operands are bf16.
        gram = jax.lax.dot_general(
            ei, ej, dimension_numbers=(((1,), (1,)), ((), ())),
            preferred_element_type=jnp.float32)              # (tb, tb)

        sq_i = sq_col_ref[pl.ds(i0, tb), :]                  # (tb, 1)
        sq_j = sq_row_ref[:, pl.ds(j0, tb)]                  # (1, tb)
        lab_i = lab_col_ref[pl.ds(i0, tb), :]                # (tb, 1)
        lab_j = lab_row_ref[:, pl.ds(j0, tb)]                # (1, tb)

        # ||e_i - e_j||^2 = ||e_i||^2 + ||e_j||^2 - 2 <e_i, e_j>  (clamped >= 0)
        dist2 = jnp.maximum(sq_i + sq_j - 2.0 * gram, 0.0)
        d = jnp.sqrt(dist2)
        neg = jnp.maximum(jnp.float32(margin) - d, 0.0)
        same = lab_i == lab_j
        tile_loss = jnp.where(same, dist2, neg * neg)        # (tb, tb) f32

        def fold(x):
            # (tb, tb) -> (8, tb): sum aligned sublane groups.  Pure VALU adds,
            # no cross-lane (XLU) work inside the grid loop.
            return x.reshape(tb // 8, 8, tb).sum(axis=0)

        # The (ii < jj) / (jj < batch) masks are only needed on diagonal tiles
        # and -- when B was padded -- on the last j block.  Interior upper
        # tiles skip the iota/compare work entirely.
        need_mask = i_blk == j_blk
        if padded:
            need_mask = jnp.logical_or(need_mask, j_blk == n_blk - 1)

        @pl.when(need_mask)
        def _masked():
            ii = i_blk * tb + jax.lax.broadcasted_iota(jnp.int32, (tb, 1), 0)
            jj = j_blk * tb + jax.lax.broadcasted_iota(jnp.int32, (1, tb), 1)
            valid = jnp.logical_and(ii < jj, jj < batch)
            out_ref[0] += fold(jnp.where(valid, tile_loss, 0.0))

        @pl.when(jnp.logical_not(need_mask))
        def _unmasked():
            out_ref[0] += fold(tile_loss)


def online_contrastive_loss(embeddings, labels, margin, *, use_bf16_matmul=False):
    """Pallas TPU implementation of OnlineContrastiveLoss.forward (all-pairs selector)."""
    B, D = embeddings.shape
    if B < 2:
        raise ValueError("OnlineContrastiveLoss needs at least 2 embeddings.")

    tb = 128 if B <= 128 else 256        # lane/MXU-aligned tile size
    bp = _round_up(B, tb)
    dp = _round_up(D, 128)               # lane-dense, MXU-friendly contraction
    n_blk = bp // tb

    e = embeddings.astype(jnp.float32)
    if use_bf16_matmul:
        # Round once and compute the norms from the *rounded* embeddings so
        # ||ei||^2 + ||ej||^2 - 2<ei,ej> uses consistent rounding.
        e = e.astype(jnp.bfloat16).astype(jnp.float32)
    sq = jnp.sum(e * e, axis=1, keepdims=True)                        # (B, 1)

    # Zero padding: zero rows change neither norms nor dot products; padded
    # rows are masked by index inside the kernel (only needed on the last
    # j block).
    e_p = jnp.zeros((bp, dp), jnp.float32).at[:B, :D].set(e)
    sq_col = jnp.zeros((bp, 1), jnp.float32).at[:B].set(sq)
    lab_col = jnp.full((bp, 1), -1, jnp.int32).at[:B, 0].set(
        labels.reshape(B).astype(jnp.int32))
    # Row variants precomputed here so the kernel never transposes (no XLU).
    sq_row = sq_col.reshape(1, bp)
    lab_row = lab_col.reshape(1, bp)

    emb_in = e_p.astype(jnp.bfloat16) if use_bf16_matmul else e_p
    esize = jnp.dtype(emb_in.dtype).itemsize

    # VMEM footprint estimate (resident embedding block dominates; constant-
    # index inputs are fetched once but may be double-buffered).
    footprint = (2 * bp * dp * esize            # embeddings
                 + 8 * bp * 4                   # norm/label col+row copies
                 + 2 * n_blk * 8 * tb * 4       # output partials
                 + 8 * tb * tb * 4)             # in-flight (tb, tb) tiles
    vmem_limit = int(min(max(32 * 1024 * 1024, footprint + 8 * 1024 * 1024),
                         128 * 1024 * 1024))
    # TODO(synk): for very large B*D where the resident embedding block would
    # exceed ~40 MiB (v7x has only 64 MiB VMEM), fall back to streaming the
    # j tile (Buffered(3)) and/or K-tiling dp with a (tb, tb) Gram accumulator.

    # Advisory cost hint: ~half the Gram matmul (upper triangle) + elementwise.
    cost = pl.CostEstimate(
        flops=int(bp * bp * dp + 8 * bp * bp // 2),
        transcendentals=int(bp * bp // 2),
        bytes_accessed=int(bp * dp * esize + 8 * bp * 4 + n_blk * 8 * tb * 4))

    kernel = functools.partial(
        _ocl_kernel, margin=float(margin), batch=B, tb=tb, n_blk=n_blk,
        padded=(bp != B))

    partial_sums = pl.pallas_call(
        kernel,
        out_shape=jax.ShapeDtypeStruct((n_blk, 8, tb), jnp.float32),
        grid_spec=pltpu.PrefetchScalarGridSpec(
            num_scalar_prefetch=0,
            grid=(n_blk, n_blk),
            in_specs=[
                pl.BlockSpec((bp, dp), lambda i, j: (0, 0)),   # embeddings (resident)
                pl.BlockSpec((bp, 1), lambda i, j: (0, 0)),    # ||e||^2 column
                pl.BlockSpec((1, bp), lambda i, j: (0, 0)),    # ||e||^2 row
                pl.BlockSpec((bp, 1), lambda i, j: (0, 0)),    # labels column
                pl.BlockSpec((1, bp), lambda i, j: (0, 0)),    # labels row
            ],
            out_specs=pl.BlockSpec((1, 8, tb), lambda i, j: (i, 0, 0)),
        ),
        compiler_params=pltpu.CompilerParams(
            # i rows are independent (per-row partial sums) -> megacore shards
            # them on v7x; j is the accumulation axis.
            dimension_semantics=("parallel", "arbitrary"),
            vmem_limit_bytes=vmem_limit,
        ),
        cost_estimate=cost,
    )(emb_in, sq_col, sq_row, lab_col, lab_row)

    # Tiny final reduce + static 1/count scaling in the wrapper.
    inv_count = 2.0 / float(B * (B - 1))
    return jnp.sum(partial_sums) * jnp.float32(inv_count)


def _reference_loss(embeddings, labels, margin):
    """Vectorized numpy reference mirroring the PyTorch forward exactly."""
    e = np.asarray(embeddings, dtype=np.float32)
    lab = np.asarray(labels)
    B = e.shape[0]
    diff = e[:, None, :] - e[None, :, :]
    dist2 = np.sum(diff * diff, axis=-1)
    iu, ju = np.triu_indices(B, k=1)
    same = lab[iu] == lab[ju]
    d2 = dist2[iu, ju]
    pos = d2[same]
    neg = np.maximum(margin - np.sqrt(d2[~same]), 0.0) ** 2
    return float(np.concatenate([pos, neg]).mean())


if __name__ == "__main__":
    margin = 1.0
    key = jax.random.PRNGKey(0)
    k_emb, k_lab, k_emb2, k_lab2 = jax.random.split(key, 4)

    # Small case (single tile, matches the module's toy size).
    B, D = 8, 32
    emb = jax.random.normal(k_emb, (B, D), dtype=jnp.float32)
    lab = jax.random.randint(k_lab, (B,), 0, 3, dtype=jnp.int32)
    loss = jax.block_until_ready(online_contrastive_loss(emb, lab, margin))
    ref = _reference_loss(emb, lab, margin)
    assert np.allclose(float(loss), ref, rtol=5e-4, atol=1e-4), (float(loss), ref)

    # Multi-tile case: exercises B/D padding, the padded-column mask, the
    # diagonal-tile mask and the below-diagonal skip (grid 2x2, one tile idle).
    B2, D2 = 300, 48
    emb2 = jax.random.normal(k_emb2, (B2, D2), dtype=jnp.float32)
    lab2 = jax.random.randint(k_lab2, (B2,), 0, 5, dtype=jnp.int32)
    loss2 = jax.block_until_ready(online_contrastive_loss(emb2, lab2, margin))
    ref2 = _reference_loss(emb2, lab2, margin)
    assert np.allclose(float(loss2), ref2, rtol=2e-3, atol=2e-3), (float(loss2), ref2)

    # bf16-MXU fast path (recommended default on v6e/v7x): elementwise math
    # stays f32; norms are taken from the bf16-rounded embeddings, so the
    # result is close but not bit-identical to the f32 path.
    loss_bf16 = jax.block_until_ready(
        online_contrastive_loss(emb2, lab2, margin, use_bf16_matmul=True))
    assert np.allclose(float(loss_bf16), ref2, rtol=5e-2, atol=5e-2), (
        float(loss_bf16), ref2)

    print("KERNEL_OK")
</pallas_src>

<mosaic_0001>
module attributes {stable_mosaic.version = 11 : i64} {
  func.func @_ocl_kernel(%arg0: i32, %arg1: i32, %arg2: memref<128x128xf32, #tpu.memory_space<vmem>>, %arg3: memref<128x1xf32, #tpu.memory_space<vmem>>, %arg4: memref<1x128xf32, #tpu.memory_space<vmem>>, %arg5: memref<128x1xi32, #tpu.memory_space<vmem>>, %arg6: memref<1x128xi32, #tpu.memory_space<vmem>>, %arg7: memref<1x8x128xf32, #tpu.memory_space<vmem>>) attributes {dimension_semantics = [#tpu.dimension_semantics<parallel>, #tpu.dimension_semantics<arbitrary>], iteration_bounds = array<i64: 1, 1>, scalar_prefetch = 0 : i64, scratch_operands = 0 : i64, tpu.core_type = #tpu.core_type<tc>, window_params = [{pipeline_mode = #tpu.pipeline_mode<synchronous>, transform_indices = @transform_0, window_bounds = array<i64: 128, 128>}, {pipeline_mode = #tpu.pipeline_mode<synchronous>, transform_indices = @transform_1, window_bounds = array<i64: 128, 1>}, {pipeline_mode = #tpu.pipeline_mode<synchronous>, transform_indices = @transform_2, window_bounds = array<i64: 1, 128>}, {pipeline_mode = #tpu.pipeline_mode<synchronous>, transform_indices = @transform_3, window_bounds = array<i64: 128, 1>}, {pipeline_mode = #tpu.pipeline_mode<synchronous>, transform_indices = @transform_4, window_bounds = array<i64: 1, 128>}, {transform_indices = @transform_5, window_bounds = array<i64: 1, 8, 128>}]} {
    %c0_i32 = arith.constant 0 : i32
    %0 = arith.cmpi eq, %arg1, %c0_i32 : i32
    %1 = arith.extui %0 : i1 to i32
    %c0_i32_0 = arith.constant 0 : i32
    %2 = arith.cmpi ne, %1, %c0_i32_0 : i32
    scf.if %2 {
      %cst = arith.constant 0.000000e+00 : f32
      %6 = vector.broadcast %cst : f32 to vector<1x8x128xf32>
      %c0 = arith.constant 0 : index
      %c0_2 = arith.constant 0 : index
      %c0_3 = arith.constant 0 : index
      %7 = vector.load %arg7[%c0, %c0_2, %c0_3] : memref<1x8x128xf32, #tpu.memory_space<vmem>>, vector<1x8x128xf32>
      tpu.vector_store %arg7[%c0, %c0_2, %c0_3], %6 {strides = array<i32>} : memref<1x8x128xf32, #tpu.memory_space<vmem>>, vector<1x8x128xf32>,
    } else {
    }
    %3 = arith.cmpi sle, %arg0, %arg1 : i32
    %4 = arith.extui %3 : i1 to i32
    %c0_i32_1 = arith.constant 0 : i32
    %5 = arith.cmpi ne, %4, %c0_i32_1 : i32
    scf.if %5 {
      %c128_i32 = arith.constant 128 : i32
      %6 = arith.muli %arg0, %c128_i32 : i32
      %7 = tpu.assume_multiple %6, 128 : i32
      %c128_i32_2 = arith.constant 128 : i32
      %8 = arith.muli %arg1, %c128_i32_2 : i32
      %9 = tpu.assume_multiple %8, 128 : i32
      %10 = arith.index_cast %7 : i32 to index
      %c0 = arith.constant 0 : index
      %11 = vector.load %arg2[%10, %c0] : memref<128x128xf32, #tpu.memory_space<vmem>>, vector<128x128xf32>
      %12 = arith.index_cast %9 : i32 to index
      %c0_3 = arith.constant 0 : index
      %13 = vector.load %arg2[%12, %c0_3] : memref<128x128xf32, #tpu.memory_space<vmem>>, vector<128x128xf32>
      %cst = arith.constant dense<0.000000e+00> : vector<128x128xf32>
      %14 = tpu.matmul %11, %13, %cst {dimension_numbers = #tpu.dot_dimension_numbers<[1], [1], [0], [0], [0, 0, 1, 0], [], []>} : vector<128x128xf32>, vector<128x128xf32>, vector<128x128xf32> -> vector<128x128xf32>
      %15 = arith.index_cast %7 : i32 to index
      %c0_4 = arith.constant 0 : index
      %16 = vector.load %arg3[%15, %c0_4] : memref<128x1xf32, #tpu.memory_space<vmem>>, vector<128x1xf32>
      %c0_5 = arith.constant 0 : index
      %17 = arith.index_cast %9 : i32 to index
      %18 = vector.load %arg4[%c0_5, %17] : memref<1x128xf32, #tpu.memory_space<vmem>>, vector<1x128xf32>
      %19 = arith.index_cast %7 : i32 to index
      %c0_6 = arith.constant 0 : index
      %20 = vector.load %arg5[%19, %c0_6] : memref<128x1xi32, #tpu.memory_space<vmem>>, vector<128x1xi32>
      %c0_7 = arith.constant 0 : index
      %21 = arith.index_cast %9 : i32 to index
      %22 = vector.load %arg6[%c0_7, %21] : memref<1x128xi32, #tpu.memory_space<vmem>>, vector<1x128xi32>
      %23 = vector.broadcast %16 : vector<128x1xf32> to vector<128x128xf32>
      %24 = vector.broadcast %18 : vector<1x128xf32> to vector<128x128xf32>
      %25 = arith.addf %23, %24 : vector<128x128xf32>
      %cst_8 = arith.constant 2.000000e+00 : f32
      %26 = vector.broadcast %cst_8 : f32 to vector<128x128xf32>
      %27 = arith.mulf %26, %14 : vector<128x128xf32>
      %28 = arith.subf %25, %27 : vector<128x128xf32>
      %cst_9 = arith.constant 0.000000e+00 : f32
      %29 = vector.broadcast %cst_9 : f32 to vector<128x128xf32>
      %30 = arith.maximumf %28, %29 : vector<128x128xf32>
      %31 = math.sqrt %30 : vector<128x128xf32>
      %cst_10 = arith.constant 1.000000e+00 : f32
      %32 = vector.broadcast %cst_10 : f32 to vector<128x128xf32>
      %33 = arith.subf %32, %31 : vector<128x128xf32>
      %cst_11 = arith.constant 0.000000e+00 : f32
      %34 = vector.broadcast %cst_11 : f32 to vector<128x128xf32>
      %35 = arith.maximumf %33, %34 : vector<128x128xf32>
      %36 = vector.broadcast %20 : vector<128x1xi32> to vector<128x128xi32>
      %37 = vector.broadcast %22 : vector<1x128xi32> to vector<128x128xi32>
      %38 = arith.cmpi eq, %36, %37 : vector<128x128xi32>
      %39 = arith.mulf %35, %35 : vector<128x128xf32>
      %40 = arith.select %38, %30, %39 : vector<128x128xi1>, vector<128x128xf32>
      %41 = arith.cmpi eq, %arg0, %arg1 : i32
      %c0_i32_12 = arith.constant 0 : i32
      %42 = arith.cmpi eq, %arg1, %c0_i32_12 : i32
      %43 = arith.ori %41, %42 : i1
      %44 = arith.extui %43 : i1 to i32
      %c0_i32_13 = arith.constant 0 : i32
      %45 = arith.cmpi ne, %44, %c0_i32_13 : i32
      scf.if %45 {
        %c128_i32_15 = arith.constant 128 : i32
        %49 = arith.muli %arg0, %c128_i32_15 : i32
        %50 = tpu.iota {dimensions = array<i32: 0>} : vector<128x1xi32>
        %51 = vector.broadcast %49 : i32 to vector<128x1xi32>
        %52 = arith.addi %51, %50 : vector<128x1xi32>
        %c128_i32_16 = arith.constant 128 : i32
        %53 = arith.muli %arg1, %c128_i32_16 : i32
        %54 = tpu.iota {dimensions = array<i32: 1>} : vector<1x128xi32>
        %55 = vector.broadcast %53 : i32 to vector<1x128xi32>
        %56 = arith.addi %55, %54 : vector<1x128xi32>
        %57 = vector.broadcast %52 : vector<128x1xi32> to vector<128x128xi32>
        %58 = vector.broadcast %56 : vector<1x128xi32> to vector<128x128xi32>
        %59 = arith.cmpi slt, %57, %58 : vector<128x128xi32>
        %c8_i32 = arith.constant 8 : i32
        %60 = vector.broadcast %c8_i32 : i32 to vector<1x128xi32>
        %61 = arith.cmpi slt, %56, %60 : vector<1x128xi32>
        %62 = vector.broadcast %61 : vector<1x128xi1> to vector<128x128xi1>
        %63 = arith.andi %59, %62 : vector<128x128xi1>
        %c0_17 = arith.constant 0 : index
        %c0_18 = arith.constant 0 : index
        %c0_19 = arith.constant 0 : index
        %64 = vector.load %arg7[%c0_17, %c0_18, %c0_19] : memref<1x8x128xf32, #tpu.memory_space<vmem>>, vector<1x8x128xf32>
        %65 = vector.shape_cast %64 : vector<1x8x128xf32> to vector<8x128xf32>
        %cst_20 = arith.constant 0.000000e+00 : f32
        %66 = vector.broadcast %cst_20 : f32 to vector<128x128xf32>
        %67 = arith.select %63, %40, %66 : vector<128x128xi1>, vector<128x128xf32>
        %68 = vector.shape_cast %67 : vector<128x128xf32> to vector<16x8x128xf32>
        %cst_21 = arith.constant dense<0.000000e+00> : vector<8x128xf32>
        %69 = vector.multi_reduction <add>, %68, %cst_21 [0] : vector<16x8x128xf32> to vector<8x128xf32>
        %70 = arith.addf %65, %69 : vector<8x128xf32>
        %c0_22 = arith.constant 0 : index
        %c0_23 = arith.constant 0 : index
        %c0_24 = arith.constant 0 : index
        %71 = vector.load %arg7[%c0_22, %c0_23, %c0_24] : memref<1x8x128xf32, #tpu.memory_space<vmem>>, vector<1x8x128xf32>
        %72 = vector.shape_cast %71 : vector<1x8x128xf32> to vector<8x128xf32>
        %73 = vector.shape_cast %70 : vector<8x128xf32> to vector<1x8x128xf32>
        tpu.vector_store %arg7[%c0_22, %c0_23, %c0_24], %73 {strides = array<i32>} : memref<1x8x128xf32, #tpu.memory_space<vmem>>, vector<1x8x128xf32>,
      } else {
      }
      %true = arith.constant true
      %46 = arith.xori %43, %true : i1
      %47 = arith.extui %46 : i1 to i32
      %c0_i32_14 = arith.constant 0 : i32
      %48 = arith.cmpi ne, %47, %c0_i32_14 : i32
      scf.if %48 {
        %c0_15 = arith.constant 0 : index
        %c0_16 = arith.constant 0 : index
        %c0_17 = arith.constant 0 : index
        %49 = vector.load %arg7[%c0_15, %c0_16, %c0_17] : memref<1x8x128xf32, #tpu.memory_space<vmem>>, vector<1x8x128xf32>
        %50 = vector.shape_cast %49 : vector<1x8x128xf32> to vector<8x128xf32>
        %51 = vector.shape_cast %40 : vector<128x128xf32> to vector<16x8x128xf32>
        %cst_18 = arith.constant dense<0.000000e+00> : vector<8x128xf32>
        %52 = vector.multi_reduction <add>, %51, %cst_18 [0] : vector<16x8x128xf32> to vector<8x128xf32>
        %53 = arith.addf %50, %52 : vector<8x128xf32>
        %c0_19 = arith.constant 0 : index
        %c0_20 = arith.constant 0 : index
        %c0_21 = arith.constant 0 : index
        %54 = vector.load %arg7[%c0_19, %c0_20, %c0_21] : memref<1x8x128xf32, #tpu.memory_space<vmem>>, vector<1x8x128xf32>
        %55 = vector.shape_cast %54 : vector<1x8x128xf32> to vector<8x128xf32>
        %56 = vector.shape_cast %53 : vector<8x128xf32> to vector<1x8x128xf32>
        tpu.vector_store %arg7[%c0_19, %c0_20, %c0_21], %56 {strides = array<i32>} : memref<1x8x128xf32, #tpu.memory_space<vmem>>, vector<1x8x128xf32>,
      } else {
      }
    } else {
    }
    return
  }
  func.func @transform_0(%arg0: i32, %arg1: i32) -> (i32, i32) {
    %c0_i32 = arith.constant 0 : i32
    %c0_i32_0 = arith.constant 0 : i32
    %c0_i32_1 = arith.constant 0 : i32
    return %c0_i32, %c0_i32_0 : i32, i32
  }
  func.func @transform_1(%arg0: i32, %arg1: i32) -> (i32, i32) {
    %c0_i32 = arith.constant 0 : i32
    %c0_i32_0 = arith.constant 0 : i32
    %c0_i32_1 = arith.constant 0 : i32
    return %c0_i32, %c0_i32_0 : i32, i32
  }
  func.func @transform_2(%arg0: i32, %arg1: i32) -> (i32, i32) {
    %c0_i32 = arith.constant 0 : i32
    %c0_i32_0 = arith.constant 0 : i32
    %c0_i32_1 = arith.constant 0 : i32
    return %c0_i32, %c0_i32_0 : i32, i32
  }
  func.func @transform_3(%arg0: i32, %arg1: i32) -> (i32, i32) {
    %c0_i32 = arith.constant 0 : i32
    %c0_i32_0 = arith.constant 0 : i32
    %c0_i32_1 = arith.constant 0 : i32
    return %c0_i32, %c0_i32_0 : i32, i32
  }
  func.func @transform_4(%arg0: i32, %arg1: i32) -> (i32, i32) {
    %c0_i32 = arith.constant 0 : i32
    %c0_i32_0 = arith.constant 0 : i32
    %c0_i32_1 = arith.constant 0 : i32
    return %c0_i32, %c0_i32_0 : i32, i32
  }
  func.func @transform_5(%arg0: i32, %arg1: i32) -> (i32, i32, i32) {
    %c0_i32 = arith.constant 0 : i32
    %c0_i32_0 = arith.constant 0 : i32
    %c0_i32_1 = arith.constant 0 : i32
    return %arg0, %c0_i32, %c0_i32_0 : i32, i32, i32
  }
}

</mosaic_0001>

<llo_original>
// kernel: tpu_custom_call.1
$region0: #{tpu_custom_call.1}
  #allocation0 [shape = 'u32[]', space=smem, size = 0x4, offset = 0x4, fixed_abs, tag = 'smem constant byte address 0x4 - core index']
  #allocation1 [shape = 'u32[72,128]{1,0:T(1,128)}', space=vmem, size = 0x9000, scoped, tag = 'internal scratch']
  %s0 = inlined_call_operand.vmem [shape: f32[128,128], index: 0, kind: input, shape index: {}]
  %s1 = inlined_call_operand.vmem [shape: f32[128,1], index: 1, kind: input, shape index: {}]
  %s2 = inlined_call_operand.vmem [shape: f32[1,128], index: 2, kind: input, shape index: {}]
  %s3 = inlined_call_operand.vmem [shape: s32[128,1], index: 3, kind: input, shape index: {}]
  %s4 = inlined_call_operand.vmem [shape: s32[1,128], index: 4, kind: input, shape index: {}]
  %s5 = inlined_call_operand.hbm [shape: f32[1,8,128], index: 5, kind: output, shape index: {}]
  %s6 = sld [smem:[#allocation0]]
  $region46: #{tpu_custom_call.1} parent=0
    _
  %s8 = ssub.s32 1, %s6
  %s9 = scalar_select 0, %s8, %s6
  $region1: #{tpu_custom_call.1} parent=0
    #allocation2 [shape = 'u8[4096]{0}', space=vmem, size = 0x1000, scoped, tag = 'output window, operand 0, single buffered']
    #allocation3 [shape = 's32[1]{0}', space=sflag, size = 0x4, scoped, tag = 'scoped memory for tpu_custom_call.1']
    %10 = vsyncpa [#allocation3], 0
    // Predicated region
    $region2: #{tpu_custom_call.1} parent=1 // pred_check
      _
    $region3: #{tpu_custom_call.1} parent=1 // pred_check_branch
      %12 = sbr.rel (0) target = $region5
    $region4: #{tpu_custom_call.1} parent=1 // pred_region
      _
    $region5: #{tpu_custom_call.1} parent=1 // pred_fallthru
      _
    // Predicated region
    $region6: #{tpu_custom_call.1} parent=1 // pred_check
      _
    $region7: #{tpu_custom_call.1} parent=1 // pred_check_branch
      %14 = sbr.rel (0) target = $region9
    $region8: #{tpu_custom_call.1} parent=1 // pred_region
      _
    $region9: #{tpu_custom_call.1} parent=1 // pred_fallthru
      _
    // Predicated region
    $region10: #{tpu_custom_call.1} parent=1 // pred_check
      _
    $region11: #{tpu_custom_call.1} parent=1 // pred_check_branch
      %16 = sbr.rel (0) target = $region13
    $region12: #{tpu_custom_call.1} parent=1 // pred_region
      _
    $region13: #{tpu_custom_call.1} parent=1 // pred_fallthru
      _
    // Predicated region
    $region14: #{tpu_custom_call.1} parent=1 // pred_check
      _
    $region15: #{tpu_custom_call.1} parent=1 // pred_check_branch
      %18 = sbr.rel (0) target = $region17
    $region16: #{tpu_custom_call.1} parent=1 // pred_region
      _
    $region17: #{tpu_custom_call.1} parent=1 // pred_fallthru
      _
    // Predicated region
    $region18: #{tpu_custom_call.1} parent=1 // pred_check
      _
    $region19: #{tpu_custom_call.1} parent=1 // pred_check_branch
      %20 = sbr.rel (0) target = $region21
    $region20: #{tpu_custom_call.1} parent=1 // pred_region
      _
    $region21: #{tpu_custom_call.1} parent=1 // pred_fallthru
      _
    %p21 = scmp.eq.s32.totalorder 0, 0
    // Predicated region
    $region22: #{tpu_custom_call.1} parent=1 // pred_check
      %p22 = pneg %p21
    $region23: #{tpu_custom_call.1} parent=1 // pred_check_branch
      %24 = sbr.rel (%p22) target = $region25
    $region24: #{tpu_custom_call.1} parent=1 // pred_region
      %25 = vst [vmem:[#allocation2] sm:$0xff] 0.0
    $region25: #{tpu_custom_call.1} parent=1 // pred_fallthru
      _
    %p26 = scmp.le.s32.totalorder 0, 0
    // Predicated region
    $region26: #{tpu_custom_call.1} parent=1 // pred_check
      %p27 = pneg %p26
    $region27: #{tpu_custom_call.1} parent=1 // pred_check_branch
      %29 = sbr.rel (%p27) target = $region29
    $region28: #{tpu_custom_call.1} parent=1 // pred_region
      %s30 = smul.u32 0, 128
      %s31 = smul.u32 0, 128
      %s32 = scalar_lea.vmem %s0, %s30
      %v33 = vld [vmem:[%s32] sm:$0xff]
      %v34 = vld [vmem:[%s32 + $0x8] sm:$0xff]
      %v35 = vld [vmem:[%s32 + $0x10] sm:$0xff]
      %v36 = vld [vmem:[%s32 + $0x18] sm:$0xff]
      %v37 = vld [vmem:[%s32 + $0x20] sm:$0xff]
      %v38 = vld [vmem:[%s32 + $0x28] sm:$0xff]
      %v39 = vld [vmem:[%s32 + $0x30] sm:$0xff]
      %v40 = vld [vmem:[%s32 + $0x38] sm:$0xff]
      %v41 = vld [vmem:[%s32 + $0x40] sm:$0xff]
      %v42 = vld [vmem:[%s32 + $0x48] sm:$0xff]
      %v43 = vld [vmem:[%s32 + $0x50] sm:$0xff]
      %v44 = vld [vmem:[%s32 + $0x58] sm:$0xff]
      %v45 = vld [vmem:[%s32 + $0x60] sm:$0xff]
      %v46 = vld [vmem:[%s32 + $0x68] sm:$0xff]
      %v47 = vld [vmem:[%s32 + $0x70] sm:$0xff]
      %v48 = vld [vmem:[%s32 + $0x78] sm:$0xff]
      %s49 = scalar_lea.vmem %s0, %s31
      %v50 = vld [vmem:[%s49] sm:$0xff]
      %v51 = vld [vmem:[%s49 + $0x8] sm:$0xff]
      %v52 = vld [vmem:[%s49 + $0x10] sm:$0xff]
      %v53 = vld [vmem:[%s49 + $0x18] sm:$0xff]
      %v54 = vld [vmem:[%s49 + $0x20] sm:$0xff]
      %v55 = vld [vmem:[%s49 + $0x28] sm:$0xff]
      %v56 = vld [vmem:[%s49 + $0x30] sm:$0xff]
      %v57 = vld [vmem:[%s49 + $0x38] sm:$0xff]
      %v58 = vld [vmem:[%s49 + $0x40] sm:$0xff]
      %v59 = vld [vmem:[%s49 + $0x48] sm:$0xff]
      %v60 = vld [vmem:[%s49 + $0x50] sm:$0xff]
      %v61 = vld [vmem:[%s49 + $0x58] sm:$0xff]
      %v62 = vld [vmem:[%s49 + $0x60] sm:$0xff]
      %v63 = vld [vmem:[%s49 + $0x68] sm:$0xff]
      %v64 = vld [vmem:[%s49 + $0x70] sm:$0xff]
      %v65 = vld [vmem:[%s49 + $0x78] sm:$0xff]
      %66 = vmatpush.xpose.msra.mxu0 %v65
      %67 = vmatpush.xpose.msra.mxu0 %v64
      %68 = vmatpush.xpose.msra.mxu0 %v63
      %69 = vmatpush.xpose.msra.mxu0 %v62
      %70 = vmatpush.xpose.msra.mxu0 %v61
      %71 = vmatpush.xpose.msra.mxu0 %v60
      %72 = vmatpush.xpose.msra.mxu0 %v59
      %73 = vmatpush.xpose.msra.mxu0 %v58
      %74 = vmatpush.xpose.msra.mxu0 %v57
      %75 = vmatpush.xpose.msra.mxu0 %v56
      %76 = vmatpush.xpose.msra.mxu0 %v55
      %77 = vmatpush.xpose.msra.mxu0 %v54
      %78 = vmatpush.xpose.msra.mxu0 %v53
      %79 = vmatpush.xpose.msra.mxu0 %v52
      %80 = vmatpush.xpose.msra.mxu0 %v51
      %81 = vmatpush.xpose.msra.mxu0 %v50
      %82 = vmatmul.f32.gmra.mxu0 %v33
      %v83 = vpop.f32.mrf.mxu0
      %v84 = vadd.f32 0.0, %v83
      %85 = vmatmul.f32.gmra.mxu0 %v34
      %v86 = vpop.f32.mrf.mxu0
      %v87 = vadd.f32 0.0, %v86
      %88 = vmatmul.f32.gmra.mxu0 %v35
      %v89 = vpop.f32.mrf.mxu0
      %v90 = vadd.f32 0.0, %v89
      %91 = vmatmul.f32.gmra.mxu0 %v36
      %v92 = vpop.f32.mrf.mxu0
      %v93 = vadd.f32 0.0, %v92
      %94 = vmatmul.f32.gmra.mxu0 %v37
      %v95 = vpop.f32.mrf.mxu0
      %v96 = vadd.f32 0.0, %v95
      %97 = vmatmul.f32.gmra.mxu0 %v38
      %v98 = vpop.f32.mrf.mxu0
      %v99 = vadd.f32 0.0, %v98
      %100 = vmatmul.f32.gmra.mxu0 %v39
      %v101 = vpop.f32.mrf.mxu0
      %v102 = vadd.f32 0.0, %v101
      %103 = vmatmul.f32.gmra.mxu0 %v40
      %v104 = vpop.f32.mrf.mxu0
      %v105 = vadd.f32 0.0, %v104
      %106 = vmatmul.f32.gmra.mxu0 %v41
      %v107 = vpop.f32.mrf.mxu0
      %v108 = vadd.f32 0.0, %v107
      %109 = vmatmul.f32.gmra.mxu0 %v42
      %v110 = vpop.f32.mrf.mxu0
      %v111 = vadd.f32 0.0, %v110
      %112 = vmatmul.f32.gmra.mxu0 %v43
      %v113 = vpop.f32.mrf.mxu0
      %v114 = vadd.f32 0.0, %v113
      %115 = vmatmul.f32.gmra.mxu0 %v44
      %v116 = vpop.f32.mrf.mxu0
      %v117 = vadd.f32 0.0, %v116
      %118 = vmatmul.f32.gmra.mxu0 %v45
      %v119 = vpop.f32.mrf.mxu0
      %v120 = vadd.f32 0.0, %v119
      %121 = vmatmul.f32.gmra.mxu0 %v46
      %v122 = vpop.f32.mrf.mxu0
      %v123 = vadd.f32 0.0, %v122
      %124 = vmatmul.f32.gmra.mxu0 %v47
      %v125 = vpop.f32.mrf.mxu0
      %v126 = vadd.f32 0.0, %v125
      %127 = vmatmul.f32.gmra.mxu0 %v48
      %v128 = vpop.f32.mrf.mxu0
      %v129 = vadd.f32 0.0, %v128
      %130 = vdwg.mxu0
      %s131 = scalar_lea.vmem %s1, %s30
      %v132 = vld [vmem:[%s131] sm:$0xff]
      %v133 = vld [vmem:[%s131 + $0x8] sm:$0xff]
      %v134 = vld [vmem:[%s131 + $0x10] sm:$0xff]
      %v135 = vld [vmem:[%s131 + $0x18] sm:$0xff]
      %v136 = vld [vmem:[%s131 + $0x20] sm:$0xff]
      %v137 = vld [vmem:[%s131 + $0x28] sm:$0xff]
      %v138 = vld [vmem:[%s131 + $0x30] sm:$0xff]
      %v139 = vld [vmem:[%s131 + $0x38] sm:$0xff]
      %v140 = vld [vmem:[%s131 + $0x40] sm:$0xff]
      %v141 = vld [vmem:[%s131 + $0x48] sm:$0xff]
      %v142 = vld [vmem:[%s131 + $0x50] sm:$0xff]
      %v143 = vld [vmem:[%s131 + $0x58] sm:$0xff]
      %v144 = vld [vmem:[%s131 + $0x60] sm:$0xff]
      %v145 = vld [vmem:[%s131 + $0x68] sm:$0xff]
      %v146 = vld [vmem:[%s131 + $0x70] sm:$0xff]
      %v147 = vld [vmem:[%s131 + $0x78] sm:$0xff]
      %s148 = sshra.s32 %s31, 7
      %s149 = sand.u32 %s31, 127
      %s150 = scalar_lea.vmem %s2, %s148
      %v151 = vld [vmem:[%s150] sm:$0x1]
      %s152 = scalar_lea.vmem %s3, %s30
      %v153 = vld [vmem:[%s152] sm:$0xff]
      %v154 = vld [vmem:[%s152 + $0x8] sm:$0xff]
      %v155 = vld [vmem:[%s152 + $0x10] sm:$0xff]
      %v156 = vld [vmem:[%s152 + $0x18] sm:$0xff]
      %v157 = vld [vmem:[%s152 + $0x20] sm:$0xff]
      %v158 = vld [vmem:[%s152 + $0x28] sm:$0xff]
      %v159 = vld [vmem:[%s152 + $0x30] sm:$0xff]
      %v160 = vld [vmem:[%s152 + $0x38] sm:$0xff]
      %v161 = vld [vmem:[%s152 + $0x40] sm:$0xff]
      %v162 = vld [vmem:[%s152 + $0x48] sm:$0xff]
      %v163 = vld [vmem:[%s152 + $0x50] sm:$0xff]
      %v164 = vld [vmem:[%s152 + $0x58] sm:$0xff]
      %v165 = vld [vmem:[%s152 + $0x60] sm:$0xff]
      %v166 = vld [vmem:[%s152 + $0x68] sm:$0xff]
      %v167 = vld [vmem:[%s152 + $0x70] sm:$0xff]
      %v168 = vld [vmem:[%s152 + $0x78] sm:$0xff]
      %s169 = scalar_lea.vmem %s4, %s148
      %v170 = vld [vmem:[%s169] sm:$0x1]
      %172 = vset.pattern.permute.xlu0 0
      %173 = vperm.xlu0 %172, %v132
      %v174 = vpop.permute.xlu0 %173
      %177 = vset.pattern.permute.xlu0 0
      %178 = vperm.xlu0 %177, %v133
      %v179 = vpop.permute.xlu0 %178
      %182 = vset.pattern.permute.xlu0 0
      %183 = vperm.xlu0 %182, %v134
      %v184 = vpop.permute.xlu0 %183
      %187 = vset.pattern.permute.xlu0 0
      %188 = vperm.xlu0 %187, %v135
      %v189 = vpop.permute.xlu0 %188
      %192 = vset.pattern.permute.xlu0 0
      %193 = vperm.xlu0 %192, %v136
      %v194 = vpop.permute.xlu0 %193
      %197 = vset.pattern.permute.xlu0 0
      %198 = vperm.xlu0 %197, %v137
      %v199 = vpop.permute.xlu0 %198
      %202 = vset.pattern.permute.xlu0 0
      %203 = vperm.xlu0 %202, %v138
      %v204 = vpop.permute.xlu0 %203
      %207 = vset.pattern.permute.xlu0 0
      %208 = vperm.xlu0 %207, %v139
      %v209 = vpop.permute.xlu0 %208
      %212 = vset.pattern.permute.xlu0 0
      %213 = vperm.xlu0 %212, %v140
      %v214 = vpop.permute.xlu0 %213
      %217 = vset.pattern.permute.xlu0 0
      %218 = vperm.xlu0 %217, %v141
      %v219 = vpop.permute.xlu0 %218
      %222 = vset.pattern.permute.xlu0 0
      %223 = vperm.xlu0 %222, %v142
      %v224 = vpop.permute.xlu0 %223
      %227 = vset.pattern.permute.xlu0 0
      %228 = vperm.xlu0 %227, %v143
      %v229 = vpop.permute.xlu0 %228
      %232 = vset.pattern.permute.xlu0 0
      %233 = vperm.xlu0 %232, %v144
      %v234 = vpop.permute.xlu0 %233
      %237 = vset.pattern.permute.xlu0 0
      %238 = vperm.xlu0 %237, %v145
      %v239 = vpop.permute.xlu0 %238
      %242 = vset.pattern.permute.xlu0 0
      %243 = vperm.xlu0 %242, %v146
      %v244 = vpop.permute.xlu0 %243
      %247 = vset.pattern.permute.xlu0 0
      %248 = vperm.xlu0 %247, %v147
      %v249 = vpop.permute.xlu0 %248
      %v252 = vperm.slane %v151, 0
      %v254 = vadd.f32 %v174, %v252
      %v255 = vadd.f32 %v179, %v252
      %v256 = vadd.f32 %v184, %v252
      %v257 = vadd.f32 %v189, %v252
      %v258 = vadd.f32 %v194, %v252
      %v259 = vadd.f32 %v199, %v252
      %v260 = vadd.f32 %v204, %v252
      %v261 = vadd.f32 %v209, %v252
      %v262 = vadd.f32 %v214, %v252
      %v263 = vadd.f32 %v219, %v252
      %v264 = vadd.f32 %v224, %v252
      %v265 = vadd.f32 %v229, %v252
      %v266 = vadd.f32 %v234, %v252
      %v267 = vadd.f32 %v239, %v252
      %v268 = vadd.f32 %v244, %v252
      %v269 = vadd.f32 %v249, %v252
      %v270 = vmul.f32 %v84, 2.0
      %v271 = vmul.f32 %v87, 2.0
      %v272 = vmul.f32 %v90, 2.0
      %v273 = vmul.f32 %v93, 2.0
      %v274 = vmul.f32 %v96, 2.0
      %v275 = vmul.f32 %v99, 2.0
      %v276 = vmul.f32 %v102, 2.0
      %v277 = vmul.f32 %v105, 2.0
      %v278 = vmul.f32 %v108, 2.0
      %v279 = vmul.f32 %v111, 2.0
      %v280 = vmul.f32 %v114, 2.0
      %v281 = vmul.f32 %v117, 2.0
      %v282 = vmul.f32 %v120, 2.0
      %v283 = vmul.f32 %v123, 2.0
      %v284 = vmul.f32 %v126, 2.0
      %v285 = vmul.f32 %v129, 2.0
      %v286 = vsub.f32 %v254, %v270
      %v287 = vsub.f32 %v255, %v271
      %v288 = vsub.f32 %v256, %v272
      %v289 = vsub.f32 %v257, %v273
      %v290 = vsub.f32 %v258, %v274
      %v291 = vsub.f32 %v259, %v275
      %v292 = vsub.f32 %v260, %v276
      %v293 = vsub.f32 %v261, %v277
      %v294 = vsub.f32 %v262, %v278
      %v295 = vsub.f32 %v263, %v279
      %v296 = vsub.f32 %v264, %v280
      %v297 = vsub.f32 %v265, %v281
      %v298 = vsub.f32 %v266, %v282
      %v299 = vsub.f32 %v267, %v283
      %v300 = vsub.f32 %v268, %v284
      %v301 = vsub.f32 %v269, %v285
      %v302 = vmax.f32 %v286, 0.0
      %v303 = vmax.f32 %v287, 0.0
      %v304 = vmax.f32 %v288, 0.0
      %v305 = vmax.f32 %v289, 0.0
      %v306 = vmax.f32 %v290, 0.0
      %v307 = vmax.f32 %v291, 0.0
      %v308 = vmax.f32 %v292, 0.0
      %v309 = vmax.f32 %v293, 0.0
      %v310 = vmax.f32 %v294, 0.0
      %v311 = vmax.f32 %v295, 0.0
      %v312 = vmax.f32 %v296, 0.0
      %v313 = vmax.f32 %v297, 0.0
      %v314 = vmax.f32 %v298, 0.0
      %v315 = vmax.f32 %v299, 0.0
      %v316 = vmax.f32 %v300, 0.0
      %v317 = vmax.f32 %v301, 0.0
      %v318 = vrsqrt.pop %v302
      %v319 = vmul.f32 %v318, %v302
      %v320 = vmul.f32 %v319, %v318
      %v321 = vmul.f32 0.5, %v320
      %v322 = vsub.f32 1.5, %v321
      %v323 = vmul.f32 %v318, %v322
      %v324 = vmul.f32 %v302, %v323
      %vm325 = vcmp.eq.f32.partialorder %v302, inf
      %v326 = vsel %vm325, %v302, %v324
      %vm327 = vcmp.eq.f32.partialorder %v302, 0.0
      %v328 = vand.u32 %v302, 2147483648
      %v329 = vsel %vm327, %v328, %v326
      %v330 = vrsqrt.pop %v303
      %v331 = vmul.f32 %v330, %v303
      %v332 = vmul.f32 %v331, %v330
      %v333 = vmul.f32 0.5, %v332
      %v334 = vsub.f32 1.5, %v333
      %v335 = vmul.f32 %v330, %v334
      %v336 = vmul.f32 %v303, %v335
      %vm337 = vcmp.eq.f32.partialorder %v303, inf
      %v338 = vsel %vm337, %v303, %v336
      %vm339 = vcmp.eq.f32.partialorder %v303, 0.0
      %v340 = vand.u32 %v303, 2147483648
      %v341 = vsel %vm339, %v340, %v338
      %v342 = vrsqrt.pop %v304
      %v343 = vmul.f32 %v342, %v304
      %v344 = vmul.f32 %v343, %v342
      %v345 = vmul.f32 0.5, %v344
      %v346 = vsub.f32 1.5, %v345
      %v347 = vmul.f32 %v342, %v346
      %v348 = vmul.f32 %v304, %v347
      %vm349 = vcmp.eq.f32.partialorder %v304, inf
      %v350 = vsel %vm349, %v304, %v348
      %vm351 = vcmp.eq.f32.partialorder %v304, 0.0
      %v352 = vand.u32 %v304, 2147483648
      %v353 = vsel %vm351, %v352, %v350
      %v354 = vrsqrt.pop %v305
      %v355 = vmul.f32 %v354, %v305
      %v356 = vmul.f32 %v355, %v354
      %v357 = vmul.f32 0.5, %v356
      %v358 = vsub.f32 1.5, %v357
      %v359 = vmul.f32 %v354, %v358
      %v360 = vmul.f32 %v305, %v359
      %vm361 = vcmp.eq.f32.partialorder %v305, inf
      %v362 = vsel %vm361, %v305, %v360
      %vm363 = vcmp.eq.f32.partialorder %v305, 0.0
      %v364 = vand.u32 %v305, 2147483648
      %v365 = vsel %vm363, %v364, %v362
      %v366 = vrsqrt.pop %v306
      %v367 = vmul.f32 %v366, %v306
      %v368 = vmul.f32 %v367, %v366
      %v369 = vmul.f32 0.5, %v368
      %v370 = vsub.f32 1.5, %v369
      %v371 = vmul.f32 %v366, %v370
      %v372 = vmul.f32 %v306, %v371
      %vm373 = vcmp.eq.f32.partialorder %v306, inf
      %v374 = vsel %vm373, %v306, %v372
      %vm375 = vcmp.eq.f32.partialorder %v306, 0.0
      %v376 = vand.u32 %v306, 2147483648
      %v377 = vsel %vm375, %v376, %v374
      %v378 = vrsqrt.pop %v307
      %v379 = vmul.f32 %v378, %v307
      %v380 = vmul.f32 %v379, %v378
      %v381 = vmul.f32 0.5, %v380
      %v382 = vsub.f32 1.5, %v381
      %v383 = vmul.f32 %v378, %v382
      %v384 = vmul.f32 %v307, %v383
      %vm385 = vcmp.eq.f32.partialorder %v307, inf
      %v386 = vsel %vm385, %v307, %v384
      %vm387 = vcmp.eq.f32.partialorder %v307, 0.0
      %v388 = vand.u32 %v307, 2147483648
      %v389 = vsel %vm387, %v388, %v386
      %v390 = vrsqrt.pop %v308
      %v391 = vmul.f32 %v390, %v308
      %v392 = vmul.f32 %v391, %v390
      %v393 = vmul.f32 0.5, %v392
      %v394 = vsub.f32 1.5, %v393
      %v395 = vmul.f32 %v390, %v394
      %v396 = vmul.f32 %v308, %v395
      %vm397 = vcmp.eq.f32.partialorder %v308, inf
      %v398 = vsel %vm397, %v308, %v396
      %vm399 = vcmp.eq.f32.partialorder %v308, 0.0
      %v400 = vand.u32 %v308, 2147483648
      %v401 = vsel %vm399, %v400, %v398
      %v402 = vrsqrt.pop %v309
      %v403 = vmul.f32 %v402, %v309
      %v404 = vmul.f32 %v403, %v402
      %v405 = vmul.f32 0.5, %v404
      %v406 = vsub.f32 1.5, %v405
      %v407 = vmul.f32 %v402, %v406
      %v408 = vmul.f32 %v309, %v407
      %vm409 = vcmp.eq.f32.partialorder %v309, inf
      %v410 = vsel %vm409, %v309, %v408
      %vm411 = vcmp.eq.f32.partialorder %v309, 0.0
      %v412 = vand.u32 %v309, 2147483648
      %v413 = vsel %vm411, %v412, %v410
      %v414 = vrsqrt.pop %v310
      %v415 = vmul.f32 %v414, %v310
      %v416 = vmul.f32 %v415, %v414
      %v417 = vmul.f32 0.5, %v416
      %v418 = vsub.f32 1.5, %v417
      %v419 = vmul.f32 %v414, %v418
      %v420 = vmul.f32 %v310, %v419
      %vm421 = vcmp.eq.f32.partialorder %v310, inf
      %v422 = vsel %vm421, %v310, %v420
      %vm423 = vcmp.eq.f32.partialorder %v310, 0.0
      %v424 = vand.u32 %v310, 2147483648
      %v425 = vsel %vm423, %v424, %v422
      %v426 = vrsqrt.pop %v311
      %v427 = vmul.f32 %v426, %v311
      %v428 = vmul.f32 %v427, %v426
      %v429 = vmul.f32 0.5, %v428
      %v430 = vsub.f32 1.5, %v429
      %v431 = vmul.f32 %v426, %v430
      %v432 = vmul.f32 %v311, %v431
      %vm433 = vcmp.eq.f32.partialorder %v311, inf
      %v434 = vsel %vm433, %v311, %v432
      %vm435 = vcmp.eq.f32.partialorder %v311, 0.0
      %v436 = vand.u32 %v311, 2147483648
      %v437 = vsel %vm435, %v436, %v434
      %v438 = vrsqrt.pop %v312
      %v439 = vmul.f32 %v438, %v312
      %v440 = vmul.f32 %v439, %v438
      %v441 = vmul.f32 0.5, %v440
      %v442 = vsub.f32 1.5, %v441
      %v443 = vmul.f32 %v438, %v442
      %v444 = vmul.f32 %v312, %v443
      %vm445 = vcmp.eq.f32.partialorder %v312, inf
      %v446 = vsel %vm445, %v312, %v444
      %vm447 = vcmp.eq.f32.partialorder %v312, 0.0
      %v448 = vand.u32 %v312, 2147483648
      %v449 = vsel %vm447, %v448, %v446
      %v450 = vrsqrt.pop %v313
      %v451 = vmul.f32 %v450, %v313
      %v452 = vmul.f32 %v451, %v450
      %v453 = vmul.f32 0.5, %v452
      %v454 = vsub.f32 1.5, %v453
      %v455 = vmul.f32 %v450, %v454
      %v456 = vmul.f32 %v313, %v455
      %vm457 = vcmp.eq.f32.partialorder %v313, inf
      %v458 = vsel %vm457, %v313, %v456
      %vm459 = vcmp.eq.f32.partialorder %v313, 0.0
      %v460 = vand.u32 %v313, 2147483648
      %v461 = vsel %vm459, %v460, %v458
      %v462 = vrsqrt.pop %v314
      %v463 = vmul.f32 %v462, %v314
      %v464 = vmul.f32 %v463, %v462
      %v465 = vmul.f32 0.5, %v464
      %v466 = vsub.f32 1.5, %v465
      %v467 = vmul.f32 %v462, %v466
      %v468 = vmul.f32 %v314, %v467
      %vm469 = vcmp.eq.f32.partialorder %v314, inf
      %v470 = vsel %vm469, %v314, %v468
      %vm471 = vcmp.eq.f32.partialorder %v314, 0.0
      %v472 = vand.u32 %v314, 2147483648
      %v473 = vsel %vm471, %v472, %v470
      %v474 = vrsqrt.pop %v315
      %v475 = vmul.f32 %v474, %v315
      %v476 = vmul.f32 %v475, %v474
      %v477 = vmul.f32 0.5, %v476
      %v478 = vsub.f32 1.5, %v477
      %v479 = vmul.f32 %v474, %v478
      %v480 = vmul.f32 %v315, %v479
      %vm481 = vcmp.eq.f32.partialorder %v315, inf
      %v482 = vsel %vm481, %v315, %v480
      %vm483 = vcmp.eq.f32.partialorder %v315, 0.0
      %v484 = vand.u32 %v315, 2147483648
      %v485 = vsel %vm483, %v484, %v482
      %v486 = vrsqrt.pop %v316
      %v487 = vmul.f32 %v486, %v316
      %v488 = vmul.f32 %v487, %v486
      %v489 = vmul.f32 0.5, %v488
      %v490 = vsub.f32 1.5, %v489
      %v491 = vmul.f32 %v486, %v490
      %v492 = vmul.f32 %v316, %v491
      %vm493 = vcmp.eq.f32.partialorder %v316, inf
      %v494 = vsel %vm493, %v316, %v492
      %vm495 = vcmp.eq.f32.partialorder %v316, 0.0
      %v496 = vand.u32 %v316, 2147483648
      %v497 = vsel %vm495, %v496, %v494
      %v498 = vrsqrt.pop %v317
      %v499 = vmul.f32 %v498, %v317
      %v500 = vmul.f32 %v499, %v498
      %v501 = vmul.f32 0.5, %v500
      %v502 = vsub.f32 1.5, %v501
      %v503 = vmul.f32 %v498, %v502
      %v504 = vmul.f32 %v317, %v503
      %vm505 = vcmp.eq.f32.partialorder %v317, inf
      %v506 = vsel %vm505, %v317, %v504
      %vm507 = vcmp.eq.f32.partialorder %v317, 0.0
      %v508 = vand.u32 %v317, 2147483648
      %v509 = vsel %vm507, %v508, %v506
      %v510 = vsub.f32 1.0, %v329
      %v511 = vsub.f32 1.0, %v341
      %v512 = vsub.f32 1.0, %v353
      %v513 = vsub.f32 1.0, %v365
      %v514 = vsub.f32 1.0, %v377
      %v515 = vsub.f32 1.0, %v389
      %v516 = vsub.f32 1.0, %v401
      %v517 = vsub.f32 1.0, %v413
      %v518 = vsub.f32 1.0, %v425
      %v519 = vsub.f32 1.0, %v437
      %v520 = vsub.f32 1.0, %v449
      %v521 = vsub.f32 1.0, %v461
      %v522 = vsub.f32 1.0, %v473
      %v523 = vsub.f32 1.0, %v485
      %v524 = vsub.f32 1.0, %v497
      %v525 = vsub.f32 1.0, %v509
      %v526 = vmax.f32 %v510, 0.0
      %v527 = vmax.f32 %v511, 0.0
      %v528 = vmax.f32 %v512, 0.0
      %v529 = vmax.f32 %v513, 0.0
      %v530 = vmax.f32 %v514, 0.0
      %v531 = vmax.f32 %v515, 0.0
      %v532 = vmax.f32 %v516, 0.0
      %v533 = vmax.f32 %v517, 0.0
      %v534 = vmax.f32 %v518, 0.0
      %v535 = vmax.f32 %v519, 0.0
      %v536 = vmax.f32 %v520, 0.0
      %v537 = vmax.f32 %v521, 0.0
      %v538 = vmax.f32 %v522, 0.0
      %v539 = vmax.f32 %v523, 0.0
      %v540 = vmax.f32 %v524, 0.0
      %v541 = vmax.f32 %v525, 0.0
      %542 = vset.pattern.permute.xlu0 0
      %543 = vperm.xlu0 %542, %v153
      %v544 = vpop.permute.xlu0 %543
      %545 = vset.pattern.permute.xlu0 0
      %546 = vperm.xlu0 %545, %v154
      %v547 = vpop.permute.xlu0 %546
      %548 = vset.pattern.permute.xlu0 0
      %549 = vperm.xlu0 %548, %v155
      %v550 = vpop.permute.xlu0 %549
      %551 = vset.pattern.permute.xlu0 0
      %552 = vperm.xlu0 %551, %v156
      %v553 = vpop.permute.xlu0 %552
      %554 = vset.pattern.permute.xlu0 0
      %555 = vperm.xlu0 %554, %v157
      %v556 = vpop.permute.xlu0 %555
      %557 = vset.pattern.permute.xlu0 0
      %558 = vperm.xlu0 %557, %v158
      %v559 = vpop.permute.xlu0 %558
      %560 = vset.pattern.permute.xlu0 0
      %561 = vperm.xlu0 %560, %v159
      %v562 = vpop.permute.xlu0 %561
      %563 = vset.pattern.permute.xlu0 0
      %564 = vperm.xlu0 %563, %v160
      %v565 = vpop.permute.xlu0 %564
      %566 = vset.pattern.permute.xlu0 0
      %567 = vperm.xlu0 %566, %v161
      %v568 = vpop.permute.xlu0 %567
      %569 = vset.pattern.permute.xlu0 0
      %570 = vperm.xlu0 %569, %v162
      %v571 = vpop.permute.xlu0 %570
      %572 = vset.pattern.permute.xlu0 0
      %573 = vperm.xlu0 %572, %v163
      %v574 = vpop.permute.xlu0 %573
      %575 = vset.pattern.permute.xlu0 0
      %576 = vperm.xlu0 %575, %v164
      %v577 = vpop.permute.xlu0 %576
      %578 = vset.pattern.permute.xlu0 0
      %579 = vperm.xlu0 %578, %v165
      %v580 = vpop.permute.xlu0 %579
      %581 = vset.pattern.permute.xlu0 0
      %582 = vperm.xlu0 %581, %v166
      %v583 = vpop.permute.xlu0 %582
      %584 = vset.pattern.permute.xlu0 0
      %585 = vperm.xlu0 %584, %v167
      %v586 = vpop.permute.xlu0 %585
      %587 = vset.pattern.permute.xlu0 0
      %588 = vperm.xlu0 %587, %v168
      %v589 = vpop.permute.xlu0 %588
      %v590 = vperm.slane %v170, 0
      %vm591 = vcmp.eq.s32.totalorder %v544, %v590
      %vm592 = vcmp.eq.s32.totalorder %v547, %v590
      %vm593 = vcmp.eq.s32.totalorder %v550, %v590
      %vm594 = vcmp.eq.s32.totalorder %v553, %v590
      %vm595 = vcmp.eq.s32.totalorder %v556, %v590
      %vm596 = vcmp.eq.s32.totalorder %v559, %v590
      %vm597 = vcmp.eq.s32.totalorder %v562, %v590
      %vm598 = vcmp.eq.s32.totalorder %v565, %v590
      %vm599 = vcmp.eq.s32.totalorder %v568, %v590
      %vm600 = vcmp.eq.s32.totalorder %v571, %v590
      %vm601 = vcmp.eq.s32.totalorder %v574, %v590
      %vm602 = vcmp.eq.s32.totalorder %v577, %v590
      %vm603 = vcmp.eq.s32.totalorder %v580, %v590
      %vm604 = vcmp.eq.s32.totalorder %v583, %v590
      %vm605 = vcmp.eq.s32.totalorder %v586, %v590
      %vm606 = vcmp.eq.s32.totalorder %v589, %v590
      %v607 = vmul.f32 %v526, %v526
      %v608 = vmul.f32 %v527, %v527
      %v609 = vmul.f32 %v528, %v528
      %v610 = vmul.f32 %v529, %v529
      %v611 = vmul.f32 %v530, %v530
      %v612 = vmul.f32 %v531, %v531
      %v613 = vmul.f32 %v532, %v532
      %v614 = vmul.f32 %v533, %v533
      %v615 = vmul.f32 %v534, %v534
      %v616 = vmul.f32 %v535, %v535
      %v617 = vmul.f32 %v536, %v536
      %v618 = vmul.f32 %v537, %v537
      %v619 = vmul.f32 %v538, %v538
      %v620 = vmul.f32 %v539, %v539
      %v621 = vmul.f32 %v540, %v540
      %v622 = vmul.f32 %v541, %v541
      %v623 = vsel %vm591, %v302, %v607
      %v624 = vsel %vm592, %v303, %v608
      %v625 = vsel %vm593, %v304, %v609
      %v626 = vsel %vm594, %v305, %v610
      %v627 = vsel %vm595, %v306, %v611
      %v628 = vsel %vm596, %v307, %v612
      %v629 = vsel %vm597, %v308, %v613
      %v630 = vsel %vm598, %v309, %v614
      %v631 = vsel %vm599, %v310, %v615
      %v632 = vsel %vm600, %v311, %v616
      %v633 = vsel %vm601, %v312, %v617
      %v634 = vsel %vm602, %v313, %v618
      %v635 = vsel %vm603, %v314, %v619
      %v636 = vsel %vm604, %v315, %v620
      %v637 = vsel %vm605, %v316, %v621
      %v638 = vsel %vm606, %v317, %v622
      %p639 = scmp.eq.s32.totalorder 0, 0
      %p640 = por %p639, %p21
      // Predicated region
      $region30: #{tpu_custom_call.1} parent=28 // pred_check
        %p641 = pneg %p640
      $region31: #{tpu_custom_call.1} parent=28 // pred_check_branch
        %643 = sbr.rel (%p641) target = $region33
      $region32: #{tpu_custom_call.1} parent=28 // pred_region
        %v644 = vlaneseq
        %v645 = vshrl.u32 %v644, 7
        %v646 = vadd.s32 %v645, 8
        %v647 = vadd.s32 %v645, 16
        %v648 = vadd.s32 %v645, 24
        %v649 = vadd.s32 %v645, 32
        %v650 = vadd.s32 %v645, 40
        %v651 = vadd.s32 %v645, 48
        %v652 = vadd.s32 %v645, 56
        %v653 = vadd.s32 %v645, 64
        %v654 = vadd.s32 %v645, 72
        %v655 = vadd.s32 %v645, 80
        %v656 = vadd.s32 %v645, 88
        %v657 = vadd.s32 %v645, 96
        %v658 = vadd.s32 %v645, 104
        %v659 = vadd.s32 %v645, 112
        %v660 = vadd.s32 %v645, 120
        %v661 = vstv %s30
        %v662 = vadd.s32 %v661, %v645
        %v663 = vadd.s32 %v661, %v646
        %v664 = vadd.s32 %v661, %v647
        %v665 = vadd.s32 %v661, %v648
        %v666 = vadd.s32 %v661, %v649
        %v667 = vadd.s32 %v661, %v650
        %v668 = vadd.s32 %v661, %v651
        %v669 = vadd.s32 %v661, %v652
        %v670 = vadd.s32 %v661, %v653
        %v671 = vadd.s32 %v661, %v654
        %v672 = vadd.s32 %v661, %v655
        %v673 = vadd.s32 %v661, %v656
        %v674 = vadd.s32 %v661, %v657
        %v675 = vadd.s32 %v661, %v658
        %v676 = vadd.s32 %v661, %v659
        %v677 = vadd.s32 %v661, %v660
        %v678 = vlaneseq
        %v679 = vand.u32 %v678, 127
        %v680 = vstv %s31
        %v681 = vadd.s32 %v680, %v679
        %vm682 = vcmp.lt.s32.totalorder %v662, %v681
        %vm683 = vcmp.lt.s32.totalorder %v663, %v681
        %vm684 = vcmp.lt.s32.totalorder %v664, %v681
        %vm685 = vcmp.lt.s32.totalorder %v665, %v681
        %vm686 = vcmp.lt.s32.totalorder %v666, %v681
        %vm687 = vcmp.lt.s32.totalorder %v667, %v681
        %vm688 = vcmp.lt.s32.totalorder %v668, %v681
        %vm689 = vcmp.lt.s32.totalorder %v669, %v681
        %vm690 = vcmp.lt.s32.totalorder %v670, %v681
        %vm691 = vcmp.lt.s32.totalorder %v671, %v681
        %vm692 = vcmp.lt.s32.totalorder %v672, %v681
        %vm693 = vcmp.lt.s32.totalorder %v673, %v681
        %vm694 = vcmp.lt.s32.totalorder %v674, %v681
        %vm695 = vcmp.lt.s32.totalorder %v675, %v681
        %vm696 = vcmp.lt.s32.totalorder %v676, %v681
        %vm697 = vcmp.lt.s32.totalorder %v677, %v681
        %vm698 = vcmp.lt.s32.totalorder %v681, 8
        %v699 = vsel %vm698, 1, 0
        %vm700 = vcmp.eq.s32.totalorder %v699, 1
        %vm701 = vmand %vm682, %vm700
        %vm702 = vmand %vm683, %vm700
        %vm703 = vmand %vm684, %vm700
        %vm704 = vmand %vm685, %vm700
        %vm705 = vmand %vm686, %vm700
        %vm706 = vmand %vm687, %vm700
        %vm707 = vmand %vm688, %vm700
        %vm708 = vmand %vm689, %vm700
        %vm709 = vmand %vm690, %vm700
        %vm710 = vmand %vm691, %vm700
        %vm711 = vmand %vm692, %vm700
        %vm712 = vmand %vm693, %vm700
        %vm713 = vmand %vm694, %vm700
        %vm714 = vmand %vm695, %vm700
        %vm715 = vmand %vm696, %vm700
        %vm716 = vmand %vm697, %vm700
        %v717 = vld [vmem:[#allocation2] sm:$0xff]
        %v718 = vsel %vm701, %v623, 0.0
        %v719 = vsel %vm702, %v624, 0.0
        %v720 = vsel %vm703, %v625, 0.0
        %v721 = vsel %vm704, %v626, 0.0
        %v722 = vsel %vm705, %v627, 0.0
        %v723 = vsel %vm706, %v628, 0.0
        %v724 = vsel %vm707, %v629, 0.0
        %v725 = vsel %vm708, %v630, 0.0
        %v726 = vsel %vm709, %v631, 0.0
        %v727 = vsel %vm710, %v632, 0.0
        %v728 = vsel %vm711, %v633, 0.0
        %v729 = vsel %vm712, %v634, 0.0
        %v730 = vsel %vm713, %v635, 0.0
        %v731 = vsel %vm714, %v636, 0.0
        %v732 = vsel %vm715, %v637, 0.0
        %v733 = vsel %vm716, %v638, 0.0
        %v734 = vadd.f32 %v718, %v719
        %v735 = vadd.f32 %v734, %v720
        %v736 = vadd.f32 %v735, %v721
        %v737 = vadd.f32 %v736, %v722
        %v738 = vadd.f32 %v737, %v723
        %v739 = vadd.f32 %v738, %v724
        %v740 = vadd.f32 %v739, %v725
        %v741 = vadd.f32 %v740, %v726
        %v742 = vadd.f32 %v741, %v727
        %v743 = vadd.f32 %v742, %v728
        %v744 = vadd.f32 %v743, %v729
        %v745 = vadd.f32 %v744, %v730
        %v746 = vadd.f32 %v745, %v731
        %v747 = vadd.f32 %v746, %v732
        %v748 = vadd.f32 %v747, %v733
        %v749 = vadd.f32 %v717, %v748
        %750 = vst [vmem:[#allocation2] sm:$0xff] %v749
      $region33: #{tpu_custom_call.1} parent=28 // pred_fallthru
        _
      %p751 = pneg %p640
      // Predicated region
      $region34: #{tpu_custom_call.1} parent=28 // pred_check
        _
      $region35: #{tpu_custom_call.1} parent=28 // pred_check_branch
        %753 = sbr.rel (%p640) target = $region37
      $region36: #{tpu_custom_call.1} parent=28 // pred_region
        %v754 = vld [vmem:[#allocation2] sm:$0xff]
        %v755 = vadd.f32 %v623, %v624
        %v756 = vadd.f32 %v755, %v625
        %v757 = vadd.f32 %v756, %v626
        %v758 = vadd.f32 %v757, %v627
        %v759 = vadd.f32 %v758, %v628
        %v760 = vadd.f32 %v759, %v629
        %v761 = vadd.f32 %v760, %v630
        %v762 = vadd.f32 %v761, %v631
        %v763 = vadd.f32 %v762, %v632
        %v764 = vadd.f32 %v763, %v633
        %v765 = vadd.f32 %v764, %v634
        %v766 = vadd.f32 %v765, %v635
        %v767 = vadd.f32 %v766, %v636
        %v768 = vadd.f32 %v767, %v637
        %v769 = vadd.f32 %v768, %v638
        %v770 = vadd.f32 %v754, %v769
        %771 = vst [vmem:[#allocation2] sm:$0xff] %v770
      $region37: #{tpu_custom_call.1} parent=28 // pred_fallthru
        _
    $region29: #{tpu_custom_call.1} parent=1 // pred_fallthru
      _
    // Predicated region
    $region38: #{tpu_custom_call.1} parent=1 // pred_check
      _
    $region39: #{tpu_custom_call.1} parent=1 // pred_check_branch
      %773 = sbr.rel (0) target = $region41
    $region40: #{tpu_custom_call.1} parent=1 // pred_region
      %775 = vsyncadd [#allocation3], 0
      %s777 = sshll.u32 [#allocation2], 4
      %s778 = int_to_ptr.vmem [resolvable:$true] %s777
      %s779 = sshll.u32 %s5, 4
      %s780 = int_to_ptr.hbm [resolvable:$true] %s779
      %782 = dma.vmem_to_hbm [thread:$0]  %s778, 128, %s780, [#allocation3]
    $region41: #{tpu_custom_call.1} parent=1 // pred_fallthru
      _
    // Predicated region
    $region42: #{tpu_custom_call.1} parent=1 // pred_check
      _
    $region43: #{tpu_custom_call.1} parent=1 // pred_check_branch
      %784 = sbr.rel (0) target = $region45
    $region44: #{tpu_custom_call.1} parent=1 // pred_region
      %786 = dma.done [#allocation3], 128
    $region45: #{tpu_custom_call.1} parent=1 // pred_fallthru
      _
    %787 = vsyncpa [#allocation3], 1

</llo_original>
